<compile_context>
chip_gen: v7x
topology: tpu7x:2x2x1
jax: 0.10.0
libtpu: 0.0.40
codegen_flags: <defaults>
</compile_context>

<pallas_src>
import jax
import jax.numpy as jnp
from jax.experimental import pallas as pl
from jax.experimental.pallas import tpu as pltpu

EPS = 1e-8
MARGIN = 0.01


def _vmem_budget():
    """Return (vmem_limit_bytes, per-buffer feat block budget) per TPU gen."""
    try:
        vmem_bytes = pltpu.get_tpu_info().vmem_capacity_bytes
    except Exception:
        vmem_bytes = 64 << 20                       # assume smallest (v7x-like)
    if vmem_bytes >= (96 << 20):                    # v5e / v6e: 128 MiB VMEM
        return 100 << 20, 8 << 20
    # v7x: 64 MiB physical; block * (2 double-buffered + ~5 f32 intermediates)
    return 48 << 20, 2 << 20


# ---------------------------------------------------------------------------
# Kernel 1: per-(batch-tile, concept) response + spatial max + clip
#   feat block: (tb, 1, Cc, HW) f32    mean/vec block: (1, 1, Cc) f32
#   out  block: (1, 1, tb, 1) f32
# ---------------------------------------------------------------------------
def _response_kernel(feat_ref, mean_ref, vec_ref, out_ref):
    feat = feat_ref[...]                              # (tb, 1, Cc, HW), f32
    mean = mean_ref[...]                              # (1, 1, Cc)
    vec = vec_ref[...]                                # (1, 1, Cc)

    fc = feat - mean[..., None]                       # center over Cc
    # response = <fc, vec> / (||fc|| + eps), fused as <fc, vec> * rsqrt(|fc|^2)
    # -> a single EUP transcendental per (b, hw) element.
    sumsq = jnp.sum(fc * fc, axis=2)                  # (tb, 1, HW)
    dotv = jnp.sum(fc * vec[..., None], axis=2)       # (tb, 1, HW)
    resp = dotv * jax.lax.rsqrt(sumsq + EPS * EPS)

    mx = jnp.max(resp, axis=-1)                       # adaptive_max_pool2d(1)
    out_ref[...] = jnp.clip((mx + 1.0) * 0.5, EPS, 1.0)[None, None, :, :]


def response_max(feat, mean, vec):
    """feat: (B, K, Cc, HW) f32 -> (K, B) clipped max concept responses."""
    B, K, Cc, HW = feat.shape
    feat = feat.astype(jnp.float32)                   # no pad, no bf16 convert
    mean3 = mean.astype(jnp.float32).reshape(K, 1, Cc)
    vec3 = vec.astype(jnp.float32).reshape(K, 1, Cc)

    vmem_limit, block_budget = _vmem_budget()

    # Batch rows per block, from the per-buffer byte budget (f32 reads).
    row_bytes = Cc * HW * 4
    tb = max(1, min(B, block_budget // row_bytes))
    # Keep >= ~4 batch grid steps when possible (pipelining + v7x 2-TC sharding).
    tb = min(tb, max(1, (B + 3) // 4))
    # Largest divisor of B not exceeding tb: no padding, no ragged edge blocks.
    while B % tb:
        tb -= 1
    nb = B // tb
    # TODO(synk): for very large feature maps where a single batch row
    # (Cc*HW*4 bytes) exceeds the block budget, add an HW grid axis (reduction
    # last) with a running-max VMEM scratch (pl.when init/finalize) instead of
    # growing the block.

    out = pl.pallas_call(
        _response_kernel,
        out_shape=jax.ShapeDtypeStruct((nb, K, tb, 1), jnp.float32),
        grid=(nb, K),
        in_specs=[
            # (Cc, HW) are full-extent -> no (8,128) padding required.
            pl.BlockSpec((tb, 1, Cc, HW), lambda i, k: (i, k, 0, 0)),
            pl.BlockSpec((1, 1, Cc), lambda i, k: (k, 0, 0)),
            pl.BlockSpec((1, 1, Cc), lambda i, k: (k, 0, 0)),
        ],
        out_specs=pl.BlockSpec((1, 1, tb, 1), lambda i, k: (i, k, 0, 0)),
        compiler_params=pltpu.CompilerParams(
            dimension_semantics=("parallel", "parallel"),  # megacore on v7x
            vmem_limit_bytes=vmem_limit,
        ),
    )(feat, mean3, vec3)

    # (nb, K, tb, 1) -> (K, B): tiny layout plumbing outside the kernel.
    return out.reshape(nb, K, tb).transpose(1, 0, 2).reshape(K, B)


# ---------------------------------------------------------------------------
# Kernel 2: distribution normalization + JS divergence + contrastive loss
#   Transposed (lane-dense) layout: batch B on the lane dim, concepts T and
#   classes NC on sublane-side dims.
#   img_t: (T, B) unnormalized, cls: (NC, T), label: (1, B) int32,
#   out: (1, 1) f32 scalar in SMEM.
# ---------------------------------------------------------------------------
def _loss_kernel(img_t_ref, cls_ref, label_ref, out_ref):
    img_t = img_t_ref[...]                                    # (T, B)
    p_t = img_t / jnp.sum(img_t, axis=0, keepdims=True)       # img_MCP_dist^T
    q = cls_ref[...]                                          # (NC, T)

    # Hoist the self-entropy terms; evaluate log2 on the (NC,T,B) broadcast once.
    h_p = jnp.sum(p_t * jnp.log2(p_t), axis=0, keepdims=True)  # (1, B)
    h_q = jnp.sum(q * jnp.log2(q), axis=1, keepdims=True)      # (NC, 1)

    m = (p_t[None, :, :] + q[:, :, None]) * 0.5               # (NC, T, B)
    log_m = jnp.log2(m)
    cross_p = jnp.sum(p_t[None, :, :] * log_m, axis=1)        # (NC, B)
    cross_q = jnp.sum(q[:, :, None] * log_m, axis=1)          # (NC, B)
    js = ((h_p - cross_p) + (h_q - cross_q)) * 0.5            # (NC, B) == JS^T

    NC, B = js.shape
    labels = label_ref[...]                                   # (1, B) int32
    onehot = (jax.lax.broadcasted_iota(jnp.int32, (NC, B), 0) == labels)
    onehot_f = onehot.astype(js.dtype)

    # same-class term: mean over batch of JS at the true label
    same_class = jnp.sum(js * onehot_f) / B

    # different-class hinge term
    mask = 1.0 - onehot_f
    diff_dist = jnp.maximum((MARGIN - js) * mask, 0.0)         # (NC, B)
    denom = jnp.sum((diff_dist != 0.0).astype(js.dtype), axis=0, keepdims=True)
    denom = jnp.where(denom == 0.0, 1.0, denom)
    diff_class = jnp.mean(jnp.sum(diff_dist, axis=0, keepdims=True) / denom)

    out_ref[0, 0] = same_class + diff_class


def js_contrastive_loss(img_t, class_dist, label_row):
    # Single-shot: (T,B)/(NC,T) are tiny at these sizes.
    # TODO(synk): before production batch sizes, tile over B with a grid
    # (q resident via a constant index_map) and accumulate the same/diff
    # partial sums in scratch with pl.when init/finalize; the (NC,T,B) log2
    # intermediate otherwise busts v7x VMEM at B ~ 1024.
    vmem_limit, _ = _vmem_budget()
    return pl.pallas_call(
        _loss_kernel,
        out_shape=jax.ShapeDtypeStruct((1, 1), jnp.float32),
        in_specs=[
            pl.BlockSpec(memory_space=pltpu.MemorySpace.VMEM),
            pl.BlockSpec(memory_space=pltpu.MemorySpace.VMEM),
            # label stays in VMEM: the vectorized one-hot compare wants it in
            # vregs; only the scalar result goes through SMEM.
            pl.BlockSpec(memory_space=pltpu.MemorySpace.VMEM),
        ],
        out_specs=pl.BlockSpec(memory_space=pltpu.MemorySpace.SMEM),
        compiler_params=pltpu.CompilerParams(vmem_limit_bytes=vmem_limit),
    )(img_t, class_dist, label_row)


# ---------------------------------------------------------------------------
# CCD_loss forward (glue in plain JAX: reshapes, list handling, concat)
# ---------------------------------------------------------------------------
def ccd_loss(concept_pool, concept_vector, concept_mean, layer, label,
             class_MCP_dist, concept_cha):
    # Per-layer pallas_calls kept separate: layers generally differ in C/H/W.
    # TODO(synk): batch shape-identical layers into one pallas_call with an
    # extra grid axis to amortize launch/pipeline-warmup overhead.
    responses_t = []                                   # each (K_l, B)
    for layer_i, feat in enumerate(concept_pool):
        cha_per_con = concept_cha[layer_i]
        B, C, H, W = feat.shape
        concept_num = C // cha_per_con
        feat_r = feat.reshape(B, concept_num, cha_per_con, H * W)
        mean = concept_mean[layer[layer_i] - 1]
        vec = concept_vector[layer[layer_i] - 1]
        responses_t.append(response_max(feat_r, mean, vec))
    img_t = jnp.concatenate(responses_t, axis=0)       # (total_concepts, B)
    label_row = label.astype(jnp.int32)[None, :]       # (1, B)
    loss = js_contrastive_loss(img_t.astype(jnp.float32),
                               class_MCP_dist.astype(jnp.float32), label_row)
    return loss[0, 0]


if __name__ == "__main__":
    key = jax.random.PRNGKey(0)
    ks = jax.random.split(key, 8)

    # Small, module-consistent shapes.
    B, H, W = 2, 8, 8
    concept_cha = [4, 4]          # channels per concept, per pooled layer
    concept_num = 4               # concepts per layer
    num_classes = 3
    layer = [1, 2]                # 1-indexed layer ids (as in the module)

    # Two pooled feature maps (NCHW), C = concept_num * cha_per_con = 16.
    concept_pool = [
        jax.random.normal(ks[0], (B, concept_num * concept_cha[0], H, W), jnp.float32),
        jax.random.normal(ks[1], (B, concept_num * concept_cha[1], H, W), jnp.float32),
    ]

    # Deterministic "parameters": per-layer concept vectors (unit norm) & means.
    v0 = jax.random.normal(ks[2], (concept_num, concept_cha[0]), jnp.float32)
    v1 = jax.random.normal(ks[3], (concept_num, concept_cha[1]), jnp.float32)
    concept_vector = [
        v0 / (jnp.linalg.norm(v0, axis=1, keepdims=True) + EPS),
        v1 / (jnp.linalg.norm(v1, axis=1, keepdims=True) + EPS),
    ]
    concept_mean = [
        0.1 * jax.random.normal(ks[4], (concept_num, concept_cha[0]), jnp.float32),
        0.1 * jax.random.normal(ks[5], (concept_num, concept_cha[1]), jnp.float32),
    ]

    total_concepts = 2 * concept_num
    class_MCP_dist = jax.nn.softmax(
        jax.random.normal(ks[6], (num_classes, total_concepts), jnp.float32), axis=-1)
    label = jax.random.randint(ks[7], (B,), 0, num_classes, jnp.int32)

    loss = ccd_loss(concept_pool, concept_vector, concept_mean, layer, label,
                    class_MCP_dist, concept_cha)
    jax.block_until_ready(loss)
    assert jnp.isfinite(loss)
    print("KERNEL_OK")
</pallas_src>

<mosaic_0001>
module attributes {stable_mosaic.version = 11 : i64} {
  func.func @_response_kernel(%arg0: i32, %arg1: i32, %arg2: memref<1x1x4x64xf32, #tpu.memory_space<vmem>>, %arg3: memref<1x1x4xf32, #tpu.memory_space<vmem>>, %arg4: memref<1x1x4xf32, #tpu.memory_space<vmem>>, %arg5: memref<1x1x1x1xf32, #tpu.memory_space<vmem>>) attributes {dimension_semantics = [#tpu.dimension_semantics<parallel>, #tpu.dimension_semantics<parallel>], iteration_bounds = array<i64: 2, 4>, scalar_prefetch = 0 : i64, scratch_operands = 0 : i64, tpu.core_type = #tpu.core_type<tc>, window_params = [{transform_indices = @transform_0, window_bounds = array<i64: 1, 1, 4, 64>}, {transform_indices = @transform_1, window_bounds = array<i64: 1, 1, 4>}, {transform_indices = @transform_2, window_bounds = array<i64: 1, 1, 4>}, {transform_indices = @transform_3, window_bounds = array<i64: 1, 1, 1, 1>}]} {
    %c0 = arith.constant 0 : index
    %c0_0 = arith.constant 0 : index
    %c0_1 = arith.constant 0 : index
    %c0_2 = arith.constant 0 : index
    %0 = vector.load %arg2[%c0, %c0_0, %c0_1, %c0_2] : memref<1x1x4x64xf32, #tpu.memory_space<vmem>>, vector<1x1x4x64xf32>
    %c0_3 = arith.constant 0 : index
    %c0_4 = arith.constant 0 : index
    %c0_5 = arith.constant 0 : index
    %1 = vector.load %arg3[%c0_3, %c0_4, %c0_5] : memref<1x1x4xf32, #tpu.memory_space<vmem>>, vector<1x1x4xf32>
    %c0_6 = arith.constant 0 : index
    %c0_7 = arith.constant 0 : index
    %c0_8 = arith.constant 0 : index
    %2 = vector.load %arg4[%c0_6, %c0_7, %c0_8] : memref<1x1x4xf32, #tpu.memory_space<vmem>>, vector<1x1x4xf32>
    %3 = vector.shape_cast %1 : vector<1x1x4xf32> to vector<1x1x4x1xf32>
    %4 = vector.broadcast %3 : vector<1x1x4x1xf32> to vector<1x1x4x64xf32>
    %5 = arith.subf %0, %4 : vector<1x1x4x64xf32>
    %6 = arith.mulf %5, %5 : vector<1x1x4x64xf32>
    %cst = arith.constant dense<0.000000e+00> : vector<1x1x64xf32>
    %7 = vector.multi_reduction <add>, %6, %cst [2] : vector<1x1x4x64xf32> to vector<1x1x64xf32>
    %8 = vector.shape_cast %2 : vector<1x1x4xf32> to vector<1x1x4x1xf32>
    %9 = vector.broadcast %8 : vector<1x1x4x1xf32> to vector<1x1x4x64xf32>
    %10 = arith.mulf %5, %9 : vector<1x1x4x64xf32>
    %cst_9 = arith.constant dense<0.000000e+00> : vector<1x1x64xf32>
    %11 = vector.multi_reduction <add>, %10, %cst_9 [2] : vector<1x1x4x64xf32> to vector<1x1x64xf32>
    %cst_10 = arith.constant 1.000000e-16 : f32
    %12 = vector.broadcast %cst_10 : f32 to vector<1x1x64xf32>
    %13 = arith.addf %7, %12 : vector<1x1x64xf32>
    %14 = math.rsqrt %13 : vector<1x1x64xf32>
    %15 = arith.mulf %11, %14 : vector<1x1x64xf32>
    %cst_11 = arith.constant dense<0xFF800000> : vector<1x1xf32>
    %16 = vector.multi_reduction <maximumf>, %15, %cst_11 [2] : vector<1x1x64xf32> to vector<1x1xf32>
    %cst_12 = arith.constant 1.000000e+00 : f32
    %17 = vector.broadcast %cst_12 : f32 to vector<1x1xf32>
    %18 = arith.addf %16, %17 : vector<1x1xf32>
    %cst_13 = arith.constant 5.000000e-01 : f32
    %19 = vector.broadcast %cst_13 : f32 to vector<1x1xf32>
    %20 = arith.mulf %18, %19 : vector<1x1xf32>
    %cst_14 = arith.constant 9.99999993E-9 : f32
    %cst_15 = arith.constant 1.000000e+00 : f32
    %21 = vector.broadcast %cst_14 : f32 to vector<1x1xf32>
    %22 = arith.maximumf %21, %20 : vector<1x1xf32>
    %23 = vector.broadcast %cst_15 : f32 to vector<1x1xf32>
    %24 = arith.minimumf %23, %22 : vector<1x1xf32>
    %25 = vector.shape_cast %24 : vector<1x1xf32> to vector<1x1x1x1xf32>
    %c0_16 = arith.constant 0 : index
    %c0_17 = arith.constant 0 : index
    %c0_18 = arith.constant 0 : index
    %c0_19 = arith.constant 0 : index
    %26 = vector.load %arg5[%c0_16, %c0_17, %c0_18, %c0_19] : memref<1x1x1x1xf32, #tpu.memory_space<vmem>>, vector<1x1x1x1xf32>
    tpu.vector_store %arg5[%c0_16, %c0_17, %c0_18, %c0_19], %25 {strides = array<i32>} : memref<1x1x1x1xf32, #tpu.memory_space<vmem>>, vector<1x1x1x1xf32>,
    return
  }
  func.func @transform_0(%arg0: i32, %arg1: i32) -> (i32, i32, i32, i32) {
    %c0_i32 = arith.constant 0 : i32
    %c0_i32_0 = arith.constant 0 : i32
    %c0_i32_1 = arith.constant 0 : i32
    return %arg0, %arg1, %c0_i32, %c0_i32_0 : i32, i32, i32, i32
  }
  func.func @transform_1(%arg0: i32, %arg1: i32) -> (i32, i32, i32) {
    %c0_i32 = arith.constant 0 : i32
    %c0_i32_0 = arith.constant 0 : i32
    %c0_i32_1 = arith.constant 0 : i32
    return %arg1, %c0_i32, %c0_i32_0 : i32, i32, i32
  }
  func.func @transform_2(%arg0: i32, %arg1: i32) -> (i32, i32, i32) {
    %c0_i32 = arith.constant 0 : i32
    %c0_i32_0 = arith.constant 0 : i32
    %c0_i32_1 = arith.constant 0 : i32
    return %arg1, %c0_i32, %c0_i32_0 : i32, i32, i32
  }
  func.func @transform_3(%arg0: i32, %arg1: i32) -> (i32, i32, i32, i32) {
    %c0_i32 = arith.constant 0 : i32
    %c0_i32_0 = arith.constant 0 : i32
    %c0_i32_1 = arith.constant 0 : i32
    return %arg0, %arg1, %c0_i32, %c0_i32_0 : i32, i32, i32, i32
  }
}

</mosaic_0001>

<llo_original>
// kernel: tpu_custom_call.1
$region0: #{tpu_custom_call.1}
  #allocation0 [shape = 'u32[]', space=smem, size = 0x4, offset = 0x4, fixed_abs, tag = 'smem constant byte address 0x4 - core index']
  #allocation1 [shape = 'u32[144,128]{1,0:T(1,128)}', space=vmem, size = 0x12000, scoped, tag = 'internal scratch']
  %s0 = inlined_call_operand.hbm [shape: f32[2,4,4,64], index: 0, kind: input, shape index: {}]
  %s1 = inlined_call_operand.hbm [shape: f32[4,1,4], index: 1, kind: input, shape index: {}]
  %s2 = inlined_call_operand.vmem [shape: f32[4,1,4], index: 2, kind: input, shape index: {}]
  %s3 = inlined_call_operand.vmem [shape: f32[2,4,1,1], index: 3, kind: output, shape index: {}]
  %s4 = sld [smem:[#allocation0]]
  $region53: #{tpu_custom_call.1} parent=0
    _
  %s6 = ssub.s32 1, %s4
  %s7 = scalar_select 0, %s6, %s4
  $region1: #{tpu_custom_call.1} parent=0
    #allocation2 [shape = 'u8[4096]{0}', space=vmem, size = 0x1000, scoped, tag = 'input window, operand 0']
    #allocation3 [shape = 's32[2]{0}', space=sflag, size = 0x8, scoped, tag = 'scoped memory for tpu_custom_call.1']
    #allocation4 [shape = 'u8[1024]{0}', space=vmem, size = 0x400, scoped, tag = 'input window, operand 1']
    #allocation5 [shape = 's32[2]{0}', space=sflag, size = 0x8, scoped, tag = 'scoped memory for tpu_custom_call.1']
    %8 = vsyncpa [#allocation3], 0
    %s9 = scalar_lea.sflag [#allocation3], 1
    %10 = vsyncpa %s9, 0
    %11 = vsyncpa [#allocation5], 0
    %s12 = scalar_lea.sflag [#allocation5], 1
    %13 = vsyncpa %s12, 0
    loop: start=0, step=1, limit=10
    $region2: #{tpu_custom_call.1} parent=1 // loop_pre_header
      _
    $region3: #{tpu_custom_call.1} parent=1 // loop_header
      %s15 = sphi 0, %s19
      %p16 = scmp.ge.s32.totalorder %s15, 10
      %s22 = sphi 0, %s34
      %s23 = sphi 0, %s30
      %s24 = sphi 0, %s22
      %s25 = sphi 0, %s23
      %s26 = sphi 0, %s24
      %s27 = sphi 0, %s25
      %s39 = sphi 0, %s41
      %s42 = sphi 0, %s39
      %s43 = sphi 0, %s42
      %s59 = sphi 0, %s43
      %s65 = sphi 0, %s67
      %s68 = sphi 0, %s65
      %s69 = sphi 0, %s68
      %s85 = sphi 0, %s69
      %s91 = sphi 0, %s93
      %s94 = sphi 0, %s91
      %s95 = sphi 0, %s94
      %s111 = sphi 0, %s95
      %s119 = sphi 0, %s121
      %s122 = sphi 0, %s119
      %s123 = sphi 0, %s122
      %s139 = sphi 0, %s123
    $region4: #{tpu_custom_call.1} parent=1 // loop_header_branch
      %18 = sbr.rel (%p16) target = $region8
    $region5: #{tpu_custom_call.1} parent=1 // loop_body
      %s20 = ssub.s32 %s15, 1
      %s21 = ssub.s32 %s15, 2
      %s28 = sadd.s32 1, %s23
      %p29 = scmp.ge.s32.totalorder %s28, 4
      %s30 = scalar_select %p29, 0, %s28
      %s31 = sadd.s32 1, %s22
      %s32 = scalar_select %p29, %s31, %s22
      %p33 = scmp.ge.s32.totalorder %s32, 2
      %s34 = scalar_select %p33, 0, %s32
      %s35 = ssub.s32 %s22, %s34
      %s36 = ssub.s32 %s23, %s30
      %s37 = sor.u32 %s35, %s36
      %p38 = scmp.eq.s32.totalorder %s37, 0
      %s40 = sadd.s32 %s39, 1
      %s41 = scalar_select %p38, %s39, %s40
      %p44 = pneg %p38
      %p45 = scmp.eq.s32.totalorder %s15, 7
      %p46 = por %p44, %p45
      %p47 = scmp.ne.s32.totalorder %s39, %s42
      %p48 = scmp.eq.s32.totalorder %s15, 0
      %p49 = por %p47, %p48
      %p50 = scmp.ne.s32.totalorder %s39, %s42
      %p51 = scmp.eq.s32.totalorder %s20, 7
      %p52 = por %p50, %p51
      %p53 = scmp.ne.s32.totalorder %s42, %s43
      %p54 = scmp.eq.s32.totalorder %s20, 0
      %p55 = por %p53, %p54
      %p56 = scmp.ne.s32.totalorder %s42, %s43
      %p57 = scmp.eq.s32.totalorder %s21, 7
      %p58 = por %p56, %p57
      %p60 = scmp.ne.s32.totalorder %s43, %s59
      %p61 = scmp.eq.s32.totalorder %s21, 0
      %p62 = por %p60, %p61
      %s63 = ssub.s32 %s23, %s30
      %p64 = scmp.eq.s32.totalorder %s63, 0
      %s66 = sadd.s32 %s65, 1
      %s67 = scalar_select %p64, %s65, %s66
      %p70 = pneg %p64
      %p71 = scmp.eq.s32.totalorder %s15, 7
      %p72 = por %p70, %p71
      %p73 = scmp.ne.s32.totalorder %s65, %s68
      %p74 = scmp.eq.s32.totalorder %s15, 0
      %p75 = por %p73, %p74
      %p76 = scmp.ne.s32.totalorder %s65, %s68
      %p77 = scmp.eq.s32.totalorder %s20, 7
      %p78 = por %p76, %p77
      %p79 = scmp.ne.s32.totalorder %s68, %s69
      %p80 = scmp.eq.s32.totalorder %s20, 0
      %p81 = por %p79, %p80
      %p82 = scmp.ne.s32.totalorder %s68, %s69
      %p83 = scmp.eq.s32.totalorder %s21, 7
      %p84 = por %p82, %p83
      %p86 = scmp.ne.s32.totalorder %s69, %s85
      %p87 = scmp.eq.s32.totalorder %s21, 0
      %p88 = por %p86, %p87
      %s89 = ssub.s32 %s23, %s30
      %p90 = scmp.eq.s32.totalorder %s89, 0
      %s92 = sadd.s32 %s91, 1
      %s93 = scalar_select %p90, %s91, %s92
      %p96 = pneg %p90
      %p97 = scmp.eq.s32.totalorder %s15, 7
      %p98 = por %p96, %p97
      %p99 = scmp.ne.s32.totalorder %s91, %s94
      %p100 = scmp.eq.s32.totalorder %s15, 0
      %p101 = por %p99, %p100
      %p102 = scmp.ne.s32.totalorder %s91, %s94
      %p103 = scmp.eq.s32.totalorder %s20, 7
      %p104 = por %p102, %p103
      %p105 = scmp.ne.s32.totalorder %s94, %s95
      %p106 = scmp.eq.s32.totalorder %s20, 0
      %p107 = por %p105, %p106
      %p108 = scmp.ne.s32.totalorder %s94, %s95
      %p109 = scmp.eq.s32.totalorder %s21, 7
      %p110 = por %p108, %p109
      %p112 = scmp.ne.s32.totalorder %s95, %s111
      %p113 = scmp.eq.s32.totalorder %s21, 0
      %p114 = por %p112, %p113
      %s115 = ssub.s32 %s22, %s34
      %s116 = ssub.s32 %s23, %s30
      %s117 = sor.u32 %s115, %s116
      %p118 = scmp.eq.s32.totalorder %s117, 0
      %s120 = sadd.s32 %s119, 1
      %s121 = scalar_select %p118, %s119, %s120
      %p124 = pneg %p118
      %p125 = scmp.eq.s32.totalorder %s15, 7
      %p126 = por %p124, %p125
      %p127 = scmp.ne.s32.totalorder %s119, %s122
      %p128 = scmp.eq.s32.totalorder %s15, 0
      %p129 = por %p127, %p128
      %p130 = scmp.ne.s32.totalorder %s119, %s122
      %p131 = scmp.eq.s32.totalorder %s20, 7
      %p132 = por %p130, %p131
      %p133 = scmp.ne.s32.totalorder %s122, %s123
      %p134 = scmp.eq.s32.totalorder %s20, 0
      %p135 = por %p133, %p134
      %p136 = scmp.ne.s32.totalorder %s122, %s123
      %p137 = scmp.eq.s32.totalorder %s21, 7
      %p138 = por %p136, %p137
      %p140 = scmp.ne.s32.totalorder %s123, %s139
      %p141 = scmp.eq.s32.totalorder %s21, 0
      %p142 = por %p140, %p141
      %p143 = scmp.le.s32.totalorder 1, %s15
      %p144 = scmp.lt.s32.totalorder %s15, 9
      %p145 = pnand %p143, %p144
      %p146 = pneg %p145
      // Predicated region
      $region9: #{tpu_custom_call.1} parent=5 // pred_check
        _
      $region10: #{tpu_custom_call.1} parent=5 // pred_check_branch
        %148 = sbr.rel (%p145) target = $region12
      $region11: #{tpu_custom_call.1} parent=5 // pred_region
        %s149 = ssub.s32 %s15, 1
      $region12: #{tpu_custom_call.1} parent=5 // pred_fallthru
        _
      %p150 = scmp.lt.s32.totalorder %s15, 8
      // Predicated region
      $region13: #{tpu_custom_call.1} parent=5 // pred_check
        %p151 = pneg %p150
      $region14: #{tpu_custom_call.1} parent=5 // pred_check_branch
        %153 = sbr.rel (%p151) target = $region16
      $region15: #{tpu_custom_call.1} parent=5 // pred_region
        // Predicated region
        $region17: #{tpu_custom_call.1} parent=15 // pred_check
          %p154 = pneg %p49
        $region18: #{tpu_custom_call.1} parent=15 // pred_check_branch
          %156 = sbr.rel (%p154) target = $region20
        $region19: #{tpu_custom_call.1} parent=15 // pred_region
          %s157 = sand.u32 %s39, 1
          %s158 = scalar_lea.sflag [#allocation3], %s157
          %s159 = sand.u32 %s39, 1
          %s160 = smul.addr %s159, 4
          %s161 = scalar_lea.vmem [#allocation2], %s160
          %s163 = ssub.s32 64, 64
          %164 = vsyncadd %s158, %s163
          %s165 = smul.addr %s22, 4
          %s166 = sadd.s32 %s23, %s165
          %s167 = smul.addr %s166, 64
          %s168 = scalar_lea.hbm %s0, %s167
          %s170 = sshll.u32 %s161, 4
          %s171 = int_to_ptr.vmem [resolvable:$true] %s170
          %173 = dma.hbm_to_vmem [thread:$0]  %s168, 64, %s171, %s158
        $region20: #{tpu_custom_call.1} parent=15 // pred_fallthru
          _
        // Predicated region
        $region21: #{tpu_custom_call.1} parent=15 // pred_check
          %p174 = pneg %p75
        $region22: #{tpu_custom_call.1} parent=15 // pred_check_branch
          %176 = sbr.rel (%p174) target = $region24
        $region23: #{tpu_custom_call.1} parent=15 // pred_region
          %s177 = sand.u32 %s65, 1
          %s178 = scalar_lea.sflag [#allocation5], %s177
          %s179 = sand.u32 %s65, 1
          %s180 = scalar_lea.vmem [#allocation4], %s179
          %s182 = ssub.s32 16, 16
          %183 = vsyncadd %s178, %s182
          %s184 = smul.addr %s23, 16
          %s185 = scalar_lea.hbm %s1, %s184
          %s187 = sshll.u32 %s180, 4
          %s188 = int_to_ptr.vmem [resolvable:$true] %s187
          %190 = dma.hbm_to_vmem [thread:$0]  %s185, 16, %s188, %s178
        $region24: #{tpu_custom_call.1} parent=15 // pred_fallthru
          _
        // Predicated region
        $region25: #{tpu_custom_call.1} parent=15 // pred_check
          %p191 = pneg %p101
        $region26: #{tpu_custom_call.1} parent=15 // pred_check_branch
          %193 = sbr.rel (%p191) target = $region28
        $region27: #{tpu_custom_call.1} parent=15 // pred_region
          %p194 = scmp.lt.s32.totalorder %s23, 3
          %s195 = scalar_select %p194, %s23, 3
          %s196 = scalar_lea.vmem %s2, %s195
        $region28: #{tpu_custom_call.1} parent=15 // pred_fallthru
          _
      $region16: #{tpu_custom_call.1} parent=5 // pred_fallthru
        _
      %p197 = scmp.le.s32.totalorder 1, %s15
      %p198 = scmp.lt.s32.totalorder %s15, 9
      %p199 = pnand %p197, %p198
      %p200 = pneg %p199
      // Predicated region
      $region29: #{tpu_custom_call.1} parent=5 // pred_check
        _
      $region30: #{tpu_custom_call.1} parent=5 // pred_check_branch
        %202 = sbr.rel (%p199) target = $region32
      $region31: #{tpu_custom_call.1} parent=5 // pred_region
        %s203 = ssub.s32 %s15, 1
        %s204 = sand.u32 %s42, 1
        %s205 = scalar_lea.sflag [#allocation3], %s204
        %s206 = sand.u32 %s42, 1
        %s207 = smul.addr %s206, 4
        %s208 = scalar_lea.vmem [#allocation2], %s207
        // Predicated region
        $region33: #{tpu_custom_call.1} parent=31 // pred_check
          %p209 = pneg %p55
        $region34: #{tpu_custom_call.1} parent=31 // pred_check_branch
          %211 = sbr.rel (%p209) target = $region36
        $region35: #{tpu_custom_call.1} parent=31 // pred_region
          %212 = dma.done %s205, 64
        $region36: #{tpu_custom_call.1} parent=31 // pred_fallthru
          _
        %s213 = sand.u32 %s68, 1
        %s214 = scalar_lea.sflag [#allocation5], %s213
        %s215 = sand.u32 %s68, 1
        %s216 = scalar_lea.vmem [#allocation4], %s215
        // Predicated region
        $region37: #{tpu_custom_call.1} parent=31 // pred_check
          %p217 = pneg %p81
        $region38: #{tpu_custom_call.1} parent=31 // pred_check_branch
          %219 = sbr.rel (%p217) target = $region40
        $region39: #{tpu_custom_call.1} parent=31 // pred_region
          %220 = dma.done %s214, 16
        $region40: #{tpu_custom_call.1} parent=31 // pred_fallthru
          _
        %s221 = sand.u32 %s42, 1
        %s222 = scalar_lea.sflag [#allocation3], %s221
        %s223 = sand.u32 %s42, 1
        %s224 = smul.addr %s223, 4
        %s225 = scalar_lea.vmem [#allocation2], %s224
        %p226 = pneg %p55
        %p227 = pneg %p52
        %s228 = sand.u32 %s68, 1
        %s229 = scalar_lea.sflag [#allocation5], %s228
        %s230 = sand.u32 %s68, 1
        %s231 = scalar_lea.vmem [#allocation4], %s230
        %p232 = pneg %p81
        %p233 = pneg %p78
        %p234 = scmp.lt.s32.totalorder %s25, 3
        %s235 = scalar_select %p234, %s25, 3
        %s236 = scalar_lea.vmem %s2, %s235
        %p237 = pneg %p107
        %p238 = pneg %p104
        %p239 = pneg %p135
        %p240 = pneg %p132
        %p241 = scmp.lt.s32.totalorder %s24, 1
        %s242 = scalar_select %p241, %s24, 1
        %p243 = scmp.lt.s32.totalorder %s25, 3
        %s244 = scalar_select %p243, %s25, 3
        %s245 = smul.addr %s242, 4
        %s246 = sadd.s32 %s244, %s245
        %s247 = scalar_lea.vmem %s3, %s246
        %p248 = scmp.lt.s32.totalorder %s25, 3
        %s249 = scalar_select %p248, %s25, 3
        %s250 = scalar_lea.vmem %s2, %s249
        %p251 = scmp.lt.s32.totalorder %s24, 1
        %s252 = scalar_select %p251, %s24, 1
        %p253 = scmp.lt.s32.totalorder %s25, 3
        %s254 = scalar_select %p253, %s25, 3
        %s255 = smul.addr %s252, 4
        %s256 = sadd.s32 %s254, %s255
        %s257 = scalar_lea.vmem %s3, %s256
        %v258 = vld [vmem:[%s208] sm:$0xf]
        %v259 = vld [vmem:[%s216] sm:$0x1]
        %v260 = vld [vmem:[%s250] sm:$0x1]
        %v261 = vlaneseq
        %v262 = vshrl.u32 %v261, 7
        %v263 = vsub.s32 0, %v262
        %v264 = vrot.slane %v259, %v263
        %266 = vbcast.lane.b32.xlu0 %v264, 256
        %v267 = vpop.permute.xlu0 %266
        %v268 = vsub.f32 %v258, %v267
        %v269 = vmul.f32 %v268, %v268
        %vm270 = vcmask 519168
        %v271 = vsel %vm270, %v269, 0.0
        %v272 = vrot.slane %v271, 4
        %v273 = vadd.f32 %v271, %v272
        %v274 = vrot.slane %v273, 2
        %v275 = vadd.f32 %v273, %v274
        %v276 = vrot.slane %v275, 1
        %v277 = vadd.f32 %v275, %v276
        %v278 = vlaneseq
        %v279 = vshrl.u32 %v278, 7
        %v280 = vsub.s32 0, %v279
        %v281 = vrot.slane %v260, %v280
        %283 = vbcast.lane.b32.xlu0 %v281, 256
        %v284 = vpop.permute.xlu0 %283
        %v285 = vmul.f32 %v268, %v284
        %v286 = vsel %vm270, %v285, 0.0
        %v287 = vrot.slane %v286, 4
        %v288 = vadd.f32 %v286, %v287
        %v289 = vrot.slane %v288, 2
        %v290 = vadd.f32 %v288, %v289
        %v291 = vrot.slane %v290, 1
        %v292 = vadd.f32 %v290, %v291
        %v293 = vadd.f32 %v277, 1e-16
        %v294 = vrsqrt.pop %v293
        %v295 = vmul.f32 %v292, %v294
        %vm296 = vcmask 523264
        %v297 = vsel %vm296, %v295, -inf
        %298 = vmax.xlane.f32.xlu0 %v297
        %v299 = vpop.xlane.xlu0 %298
        %v300 = vadd.f32 %v299, 1.0
        %v301 = vmul.f32 %v300, 0.5
        %v302 = vmax.f32 %v301, 1e-08
        %v303 = vmin.f32 %v302, 1.0
        %vm304 = vcmask 0
        %305 = vst.msk [vmem:[%s257] sm:$0x1] %vm304, %v303
        %p306 = scmp.lt.s32.totalorder %s24, 1
        %s307 = scalar_select %p306, %s24, 1
        %p308 = scmp.lt.s32.totalorder %s25, 3
        %s309 = scalar_select %p308, %s25, 3
        %s310 = smul.addr %s307, 4
        %s311 = sadd.s32 %s309, %s310
        %s312 = scalar_lea.vmem %s3, %s311
        // Predicated region
        $region41: #{tpu_custom_call.1} parent=31 // pred_check
          %p313 = pneg %p132
        $region42: #{tpu_custom_call.1} parent=31 // pred_check_branch
          %315 = sbr.rel (%p313) target = $region44
        $region43: #{tpu_custom_call.1} parent=31 // pred_region
          _
        $region44: #{tpu_custom_call.1} parent=31 // pred_fallthru
          _
      $region32: #{tpu_custom_call.1} parent=5 // pred_fallthru
        _
      %p316 = scmp.le.s32.totalorder 2, %s15
      // Predicated region
      $region45: #{tpu_custom_call.1} parent=5 // pred_check
        %p317 = pneg %p316
      $region46: #{tpu_custom_call.1} parent=5 // pred_check_branch
        %319 = sbr.rel (%p317) target = $region48
      $region47: #{tpu_custom_call.1} parent=5 // pred_region
        %s320 = ssub.s32 %s15, 2
        // Predicated region
        $region49: #{tpu_custom_call.1} parent=47 // pred_check
          %p321 = pneg %p138
        $region50: #{tpu_custom_call.1} parent=47 // pred_check_branch
          %323 = sbr.rel (%p321) target = $region52
        $region51: #{tpu_custom_call.1} parent=47 // pred_region
          %p324 = scmp.lt.s32.totalorder %s26, 1
          %s325 = scalar_select %p324, %s26, 1
          %p326 = scmp.lt.s32.totalorder %s27, 3
          %s327 = scalar_select %p326, %s27, 3
          %s328 = smul.addr %s325, 4
          %s329 = sadd.s32 %s327, %s328
          %s330 = scalar_lea.vmem %s3, %s329
        $region52: #{tpu_custom_call.1} parent=47 // pred_fallthru
          _
      $region48: #{tpu_custom_call.1} parent=5 // pred_fallthru
        _
    $region6: #{tpu_custom_call.1} parent=1 // loop_footer
      %s19 = sadd.s32 1, %s15
    $region7: #{tpu_custom_call.1} parent=1 // loop_footer_branch
      %14 = sbr.rel target = $region3
    $region8: #{tpu_custom_call.1} parent=1 // loop_exit
      _
    %331 = vsyncpa [#allocation3], 1
    %s332 = scalar_lea.sflag [#allocation3], 1
    %333 = vsyncpa %s332, 1
    %334 = vsyncpa [#allocation5], 1
    %s335 = scalar_lea.sflag [#allocation5], 1
    %336 = vsyncpa %s335, 1

</llo_original>
